<compile_context>
chip_gen: v6e
topology: v6e:2x2x1
jax: 0.10.0
libtpu: 0.0.40
codegen_flags: <defaults>
</compile_context>

<pallas_src>
import functools

import jax
import jax.numpy as jnp
from jax.experimental import pallas as pl
from jax.experimental.pallas import tpu as pltpu


def _gem_kernel(p_ref, x_ref, o_ref, *, eps, inv_hw):
    # p_ref: SMEM (1,) f32 -- learnable GeM exponent.
    # x_ref: VMEM (TILE_NC, HW) input block (HBM dtype; widened in-register).
    # o_ref: VMEM (1, TILE_NC) lane-dense output block.
    p = p_ref[0]
    inv_p = 1.0 / p                               # hoisted scalar math
    x = x_ref[...].astype(jnp.float32)            # widen only in-register
    xc = jnp.maximum(x, eps)                      # clamp(min=eps); xc > 0
    xp = jnp.exp(p * jnp.log(xc))                 # xc ** p (exact for xc > 0)
    s = jnp.sum(xp, axis=-1)                      # per-row sum -> (TILE_NC,), lane-major
    m = s * inv_hw                                # mean over the (H*W) window
    # Epilogue m ** (1/p) on the lane-dense row: ~16x fewer EUP vreg-ops than a
    # (TILE_NC, 1) column, and an unmasked lane-dense store.
    o_ref[...] = jnp.exp(jnp.log(m) * inv_p).reshape(1, -1).astype(o_ref.dtype)


def _round_up(a, b):
    return ((a + b - 1) // b) * b


def _pick_tile_nc(nc, hw, in_itemsize, *, working_set_bytes=32 << 20, min_grid=8):
    """Row tile for the (NC, HW) slab.

    Sized against the in-kernel working set (double-buffered input block in
    its HBM dtype + ~3 live f32 temporaries from the widen/clamp/pow chain),
    not just the raw block, so big blocks do not spill on v7x's 64 MiB VMEM.
    Returns a multiple of 128 (lane-dense output blocks) or exactly NC.
    """
    bytes_per_row = hw * (2 * in_itemsize + 3 * 4)
    budget_rows = max(int(working_set_bytes // max(bytes_per_row, 1)), 8)

    if nc <= 128:
        return nc                                 # single full block, grid == 1

    cap_vmem = max(128, (budget_rows // 128) * 128)
    # Keep >= ~min_grid steps so the double-buffer overlaps DMA with compute
    # and v7x's two TensorCores both get row tiles.
    cap_grid = max(128, _round_up(-(-nc // min_grid), 128))
    cap_nc = (nc // 128) * 128                    # never exceed the array
    return min(cap_vmem, cap_grid, cap_nc)


def gem_pallas(x, p, eps=1e-6):
    """x: (N, C, H, W); p: (1,) learnable exponent.  Returns (N, C, 1, 1)."""
    N, C, H, W = x.shape
    NC, HW = N * C, H * W
    x2d = x.reshape(NC, HW)
    p = jnp.asarray(p, jnp.float32).reshape(1)

    in_itemsize = jnp.dtype(x.dtype).itemsize
    tile_nc = _pick_tile_nc(NC, HW, in_itemsize)
    grid = (pl.cdiv(NC, tile_nc),)                # ragged last block: no pad copy

    # Scoped-VMEM limit from the actual footprint (+50% headroom), kept under
    # v7x's 64 MiB/TC physical VMEM.
    footprint = tile_nc * HW * (2 * in_itemsize + 3 * 4) + (1 << 20)
    vmem_limit = int(min(max(footprint * 3 // 2, 32 << 20), 60 << 20))

    out = pl.pallas_call(
        functools.partial(_gem_kernel, eps=float(eps), inv_hw=1.0 / HW),
        out_shape=jax.ShapeDtypeStruct((1, NC), x.dtype),
        grid=grid,
        in_specs=[
            pl.BlockSpec(memory_space=pltpu.MemorySpace.SMEM),   # p scalar, untiled
            pl.BlockSpec((tile_nc, HW), lambda i: (i, 0)),       # x row tile
        ],
        out_specs=pl.BlockSpec((1, tile_nc), lambda i: (0, i)),  # lane-dense row
        compiler_params=pltpu.CompilerParams(
            dimension_semantics=("parallel",),     # shard row tiles across TCs
            vmem_limit_bytes=vmem_limit,
        ),
        cost_estimate=pl.CostEstimate(
            flops=3 * NC * HW + 4 * NC,
            transcendentals=2 * NC * HW + 2 * NC,
            bytes_accessed=NC * HW * in_itemsize + NC * in_itemsize,
        ),
    )(p, x2d)

    return out.reshape(N, C, 1, 1)


if __name__ == "__main__":
    key = jax.random.PRNGKey(0)

    # GeM.__init__: p = nn.Parameter(torch.ones(1) * 3) -> deterministic init.
    p = jnp.ones((1,), dtype=jnp.float32) * 3.0
    eps = 1e-6

    def ref(x):
        xc = jnp.maximum(x, eps)
        return jnp.mean(xc ** p[0], axis=(-2, -1), keepdims=True) ** (1.0 / p[0])

    # Case 1: small shape consistent with the module's typical use.
    N, C, H, W = 2, 4, 16, 16
    x1 = jax.random.normal(key, (N, C, H, W), dtype=jnp.float32)
    y1 = gem_pallas(x1, p, eps)
    jax.block_until_ready(y1)
    assert y1.shape == (N, C, 1, 1)
    err1 = float(jnp.max(jnp.abs(y1 - ref(x1))))
    assert jnp.allclose(y1, ref(x1), rtol=1e-4, atol=1e-5), err1

    # Case 2: ragged NC (not a multiple of the 128-row tile) and HW=49
    # (not 128-aligned) -- exercises the no-pad cdiv grid / masked-writeback
    # path introduced by the perf review.
    k2 = jax.random.split(key, 2)[1]
    x2 = jax.random.normal(k2, (2, 150, 7, 7), dtype=jnp.float32)
    y2 = gem_pallas(x2, p, eps)
    jax.block_until_ready(y2)
    assert y2.shape == (2, 150, 1, 1)
    err2 = float(jnp.max(jnp.abs(y2 - ref(x2))))
    assert jnp.allclose(y2, ref(x2), rtol=1e-4, atol=1e-5), err2

    print("KERNEL_OK")
</pallas_src>

<mosaic_0001>
module attributes {stable_mosaic.version = 11 : i64} {
  func.func @_gem_kernel(%arg0: i32, %arg1: memref<1xf32, #tpu.memory_space<smem>>, %arg2: memref<8x256xf32, #tpu.memory_space<vmem>>, %arg3: memref<1x8xf32, #tpu.memory_space<vmem>>) attributes {dimension_semantics = [#tpu.dimension_semantics<parallel>], iteration_bounds = array<i64: 1>, scalar_prefetch = 0 : i64, scratch_operands = 0 : i64, tpu.core_type = #tpu.core_type<tc>, window_params = [{transform_indices = @transform_0, window_bounds = array<i64: 1>}, {transform_indices = @transform_1, window_bounds = array<i64: 8, 256>}, {transform_indices = @transform_2, window_bounds = array<i64: 1, 8>}]} {
    %c0 = arith.constant 0 : index
    %0 = memref.load %arg1[%c0] : memref<1xf32, #tpu.memory_space<smem>>
    %cst = arith.constant 1.000000e+00 : f32
    %1 = arith.divf %cst, %0 : f32
    %c0_0 = arith.constant 0 : index
    %c0_1 = arith.constant 0 : index
    %2 = vector.load %arg2[%c0_0, %c0_1] : memref<8x256xf32, #tpu.memory_space<vmem>>, vector<8x256xf32>
    %cst_2 = arith.constant 9.99999997E-7 : f32
    %3 = vector.broadcast %cst_2 : f32 to vector<8x256xf32>
    %4 = arith.maximumf %2, %3 : vector<8x256xf32>
    %5 = math.log %4 : vector<8x256xf32>
    %6 = vector.broadcast %0 : f32 to vector<8x256xf32>
    %7 = arith.mulf %6, %5 : vector<8x256xf32>
    %8 = math.exp %7 : vector<8x256xf32>
    %cst_3 = arith.constant dense<0.000000e+00> : vector<8xf32>
    %9 = vector.multi_reduction <add>, %8, %cst_3 [1] : vector<8x256xf32> to vector<8xf32>
    %cst_4 = arith.constant 3.906250e-03 : f32
    %10 = vector.broadcast %cst_4 : f32 to vector<8xf32>
    %11 = arith.mulf %9, %10 : vector<8xf32>
    %12 = math.log %11 : vector<8xf32>
    %13 = vector.broadcast %1 : f32 to vector<8xf32>
    %14 = arith.mulf %12, %13 : vector<8xf32>
    %15 = math.exp %14 : vector<8xf32>
    %16 = vector.shape_cast %15 : vector<8xf32> to vector<1x8xf32>
    %c0_5 = arith.constant 0 : index
    %c0_6 = arith.constant 0 : index
    %17 = vector.load %arg3[%c0_5, %c0_6] : memref<1x8xf32, #tpu.memory_space<vmem>>, vector<1x8xf32>
    tpu.vector_store %arg3[%c0_5, %c0_6], %16 {strides = array<i32>} : memref<1x8xf32, #tpu.memory_space<vmem>>, vector<1x8xf32>,
    return
  }
  func.func @transform_0(%arg0: i32) -> i32 {
    %c0_i32 = arith.constant 0 : i32
    %c0_i32_0 = arith.constant 0 : i32
    return %c0_i32 : i32
  }
  func.func @transform_1(%arg0: i32) -> (i32, i32) {
    %c0_i32 = arith.constant 0 : i32
    %c0_i32_0 = arith.constant 0 : i32
    return %arg0, %c0_i32 : i32, i32
  }
  func.func @transform_2(%arg0: i32) -> (i32, i32) {
    %c0_i32 = arith.constant 0 : i32
    %c0_i32_0 = arith.constant 0 : i32
    return %c0_i32, %arg0 : i32, i32
  }
}

</mosaic_0001>

<llo_original>
// kernel: tpu_custom_call.1
$region0: #{tpu_custom_call.1}
  #allocation0 [shape = 'u32[]', space=smem, size = 0x4, offset = 0x4, fixed_abs, tag = 'smem constant byte address 0x4 - core index']
  #allocation1 [shape = 'u32[144,128]{1,0:T(1,128)}', space=vmem, size = 0x12000, scoped, tag = 'internal scratch']
  #allocation2 [shape = 'f32[1]{0:T(128)S(6)}', space=smem, size = 0x200, scoped, tag = 'scoped memory for tpu_custom_call.1']
  %s0 = inlined_call_operand.<no memory space> [shape: f32[1], index: 0, kind: input, shape index: {}]
  %s1 = inlined_call_operand.hbm [shape: f32[8,256], index: 1, kind: input, shape index: {}]
  %s2 = inlined_call_operand.hbm [shape: f32[1,8], index: 2, kind: output, shape index: {}]
  %s3 = sld [smem:[#allocation0]]
  $region22: #{tpu_custom_call.1} parent=0
    _
  %s5 = ssub.s32 1, %s3
  %s6 = scalar_select 0, %s5, %s3
  %7 = sst [smem:[#allocation2]] %s0
  $region1: #{tpu_custom_call.1} parent=0
    #allocation3 [shape = 'u8[8192]{0}', space=vmem, size = 0x2000, scoped, tag = 'input window, operand 1, single buffered']
    #allocation4 [shape = 's32[1]{0}', space=sflag, size = 0x4, scoped, tag = 'scoped memory for tpu_custom_call.1']
    #allocation5 [shape = 's32[1]{0}', space=sflag, size = 0x4, scoped, tag = 'scoped memory for tpu_custom_call.1']
    #allocation6 [shape = 'u8[512]{0}', space=vmem, size = 0x400, scoped, tag = 'output window, operand 0, single buffered']
    %8 = vsyncpa [#allocation4], 0
    %9 = vsyncpa [#allocation5], 0
    // Predicated region
    $region2: #{tpu_custom_call.1} parent=1 // pred_check
      _
    $region3: #{tpu_custom_call.1} parent=1 // pred_check_branch
      %11 = sbr.rel (0) target = $region5
    $region4: #{tpu_custom_call.1} parent=1 // pred_region
      _
    $region5: #{tpu_custom_call.1} parent=1 // pred_fallthru
      _
    // Predicated region
    $region6: #{tpu_custom_call.1} parent=1 // pred_check
      _
    $region7: #{tpu_custom_call.1} parent=1 // pred_check_branch
      %13 = sbr.rel (0) target = $region9
    $region8: #{tpu_custom_call.1} parent=1 // pred_region
      %s15 = ssub.s32 256, 256
      %16 = vsyncadd [#allocation4], %s15
      %s18 = sshll.u32 [#allocation3], 4
      %s19 = int_to_ptr.vmem [resolvable:$true] %s18
      %21 = dma.hbm_to_vmem [thread:$0]  %s1, 256, %s19, [#allocation4]
    $region9: #{tpu_custom_call.1} parent=1 // pred_fallthru
      _
    // Predicated region
    $region10: #{tpu_custom_call.1} parent=1 // pred_check
      _
    $region11: #{tpu_custom_call.1} parent=1 // pred_check_branch
      %23 = sbr.rel (0) target = $region13
    $region12: #{tpu_custom_call.1} parent=1 // pred_region
      %24 = dma.done [#allocation4], 256
    $region13: #{tpu_custom_call.1} parent=1 // pred_fallthru
      _
    %s25 = sld [smem:[#allocation2]]
    %v26 = vstv %s25
    %v27 = vrcp.pop %v26
    %s28 = vtos %v27
    %v29 = vld [vmem:[#allocation3] sm:$0xff]
    %v30 = vld [vmem:[#allocation3 + $0x8] sm:$0xff]
    %v31 = vmax.f32 %v29, 1e-06
    %v32 = vmax.f32 %v30, 1e-06
    %v33 = vlog2.pop %v31
    %v34 = vmul.f32 %v33, 0.6931472
    %v35 = vlog2.pop %v32
    %v36 = vmul.f32 %v35, 0.6931472
    %v37 = vstv %s25
    %v38 = vmul.f32 %v37, %v34
    %v39 = vmul.f32 %v37, %v36
    %v40 = vmul.f32 %v38, 1.442695
    %v41 = vpow.pop %v40
    %v42 = vmul.f32 %v39, 1.442695
    %v43 = vpow.pop %v42
    %v44 = vadd.f32 %v41, %v43
    %45 = vadd.xlane.f32.xlu0 %v44
    %v46 = vpop.xlane.xlu0 %45
    %v47 = vmul.f32 %v46, 0.00390625
    %v48 = vlog2.pop %v47
    %v49 = vmul.f32 %v48, 0.6931472
    %v50 = vstv %s28
    %v51 = vmul.f32 %v49, %v50
    %v52 = vmul.f32 %v51, 1.442695
    %v53 = vpow.pop %v52
    %v55 = vlaneseq
    %v56 = vand.u32 %v55, 127
    %v57 = vlaneseq
    %v58 = vshrl.u32 %v57, 7
    %v59 = vsub.s32 %v56, %v58
    %v60 = vrot.slane %v53, %v59
    %vm62 = vcmask 57344
    %63 = vst.msk [vmem:[#allocation6] sm:$0x1] %vm62, %v60
    // Predicated region
    $region14: #{tpu_custom_call.1} parent=1 // pred_check
      _
    $region15: #{tpu_custom_call.1} parent=1 // pred_check_branch
      %65 = sbr.rel (0) target = $region17
    $region16: #{tpu_custom_call.1} parent=1 // pred_region
      %s67 = ssub.s32 16, 16
      %68 = vsyncadd [#allocation5], %s67
      %s70 = sshll.u32 [#allocation6], 4
      %s71 = int_to_ptr.vmem [resolvable:$true] %s70
      %73 = dma.vmem_to_hbm [thread:$0]  %s71, 16, %s2, [#allocation5]
    $region17: #{tpu_custom_call.1} parent=1 // pred_fallthru
      _
    // Predicated region
    $region18: #{tpu_custom_call.1} parent=1 // pred_check
      _
    $region19: #{tpu_custom_call.1} parent=1 // pred_check_branch
      %75 = sbr.rel (0) target = $region21
    $region20: #{tpu_custom_call.1} parent=1 // pred_region
      %76 = dma.done [#allocation5], 16
    $region21: #{tpu_custom_call.1} parent=1 // pred_fallthru
      _
    %77 = vsyncpa [#allocation4], 1
    %78 = vsyncpa [#allocation5], 1

</llo_original>
